<compile_context>
chip_gen: v7x
topology: tpu7x:2x2x1
jax: 0.10.0
libtpu: 0.0.40
codegen_flags: <defaults>
</compile_context>

<pallas_src>
import functools

import jax
import jax.numpy as jnp
from jax.experimental import pallas as pl
from jax.experimental.pallas import tpu as pltpu


def _round_up(x, m):
    return (x + m - 1) // m * m


def convlstm_cell_kernel(w_ref, b_ref, a_ref, s_ref, x_ref, c_ref,
                         h_out_ref, c_out_ref, *, hidden):
    """One (batch, spatial-strip) step of the ConvLSTM cell.

    w_ref : (G, Kp)      compute_dtype  im2col weights, i/f/o rows pre-scaled by 0.5
    b_ref : (G, 1)       f32            bias (i/f/o rows pre-scaled by 0.5)
    a_ref : (G, 1)       f32            post-tanh scale (0.5 for i/f/o rows, 1 for g)
    s_ref : (G, 1)       f32            post-tanh shift (0.5 for i/f/o rows, 0 for g)
    x_ref : (Kp, Mt)     compute_dtype  im2col patch slab for this spatial strip
    c_ref : (hidden, Mt) f32            current cell state
    outs  : (hidden, Mt) f32            h_next, c_next
    """
    # Whole convolution for this strip: a single MXU matmul (f32 accumulation).
    acc = jnp.dot(w_ref[...], x_ref[...], preferred_element_type=jnp.float32)
    acc = acc + b_ref[...]                      # (G,1) lane-broadcast

    # Gates: one full-width tanh pass.  sigmoid(x) = 0.5*tanh(x/2) + 0.5 with
    # the /2 folded into the weights/bias and the affine applied via the
    # per-row constants a/s (identity for the g rows).
    z = jnp.tanh(acc) * a_ref[...] + s_ref[...]

    # torch.split order along output channels: i, f, o, g  (sublane slices).
    i_g = z[0 * hidden:1 * hidden, :]
    f_g = z[1 * hidden:2 * hidden, :]
    o_g = z[2 * hidden:3 * hidden, :]
    g_g = z[3 * hidden:4 * hidden, :]

    c_next = f_g * c_ref[...] + i_g * g_g       # lane-dense (hidden, Mt)
    c_out_ref[...] = c_next
    h_out_ref[...] = o_g * jnp.tanh(c_next)


def convlstm_cell(x_nchw, h_nchw, c_nchw, weight_oihw, bias, kernel_size,
                  *, tile_m=128, compute_dtype=jnp.bfloat16):
    """ConvLSTMCell.forward.  Inputs/outputs are NCHW like the PyTorch module.

    compute_dtype: dtype of the conv operands fed to the MXU.  bf16 (default)
    is MXU-native on v6e/v7x; use jnp.float32 for PyTorch-exact numerics.
    """
    KH, KW = kernel_size
    ph, pw = KH // 2, KW // 2
    B, Cin, H, W = x_nchw.shape
    hidden = h_nchw.shape[1]
    Ct = Cin + hidden
    G = 4 * hidden
    K = KH * KW * Ct
    Kp = _round_up(K, 128)            # pad contraction to a clean lane multiple
    M = H * W
    Mp = _round_up(M, tile_m)         # pad spatial so every strip is tile_m wide
    assert Mp % tile_m == 0
    n_strips = Mp // tile_m

    # ---- im2col slab in the native NCHW layout (channels x spatial) ----
    comb = jnp.concatenate([x_nchw, h_nchw], axis=1).astype(compute_dtype)  # (B,Ct,H,W)
    comb_p = jnp.pad(comb, ((0, 0), (0, 0), (ph, ph), (pw, pw)))
    patches = [comb_p[:, :, kh:kh + H, kw:kw + W]
               for kh in range(KH) for kw in range(KW)]
    slab = jnp.concatenate(patches, axis=1).reshape(B, K, M)                # (B,K,M)
    slab = jnp.pad(slab, ((0, 0), (0, Kp - K), (0, Mp - M)))

    c = c_nchw.reshape(B, hidden, M).astype(jnp.float32)
    c = jnp.pad(c, ((0, 0), (0, 0), (0, Mp - M)))

    # ---- weights: OIHW -> (G, K) matching the slab's (tap, channel) order ----
    # 0.5 sigmoid pre-scale folded into the i/f/o rows (exact power-of-two).
    w2 = jnp.transpose(weight_oihw, (0, 2, 3, 1)).reshape(G, K).astype(compute_dtype)
    is_sig = jnp.arange(G) < 3 * hidden
    scale = jnp.where(is_sig, 0.5, 1.0).astype(jnp.float32)
    w2 = (w2 * scale[:, None].astype(compute_dtype)).astype(compute_dtype)
    w2 = jnp.pad(w2, ((0, 0), (0, Kp - K)))
    b2 = (bias.astype(jnp.float32) * scale).reshape(G, 1)
    a2 = scale.reshape(G, 1)
    s2 = jnp.where(is_sig, 0.5, 0.0).astype(jnp.float32).reshape(G, 1)

    kernel = functools.partial(convlstm_cell_kernel, hidden=hidden)

    h_out, c_out = pl.pallas_call(
        kernel,
        out_shape=(jax.ShapeDtypeStruct((B, hidden, Mp), jnp.float32),
                   jax.ShapeDtypeStruct((B, hidden, Mp), jnp.float32)),
        grid=(B, n_strips),
        in_specs=[
            pl.BlockSpec((G, Kp), lambda b, j: (0, 0)),                 # weights (resident)
            pl.BlockSpec((G, 1), lambda b, j: (0, 0)),                  # bias
            pl.BlockSpec((G, 1), lambda b, j: (0, 0)),                  # post-tanh scale
            pl.BlockSpec((G, 1), lambda b, j: (0, 0)),                  # post-tanh shift
            pl.BlockSpec((None, Kp, tile_m), lambda b, j: (b, 0, j)),   # im2col strip
            pl.BlockSpec((None, hidden, tile_m), lambda b, j: (b, 0, j)),  # c strip
        ],
        out_specs=(
            pl.BlockSpec((None, hidden, tile_m), lambda b, j: (b, 0, j)),
            pl.BlockSpec((None, hidden, tile_m), lambda b, j: (b, 0, j)),
        ),
        compiler_params=pltpu.CompilerParams(
            dimension_semantics=("parallel", "parallel")),
    )(w2, b2, a2, s2, slab, c)

    # Drop the spatial padding; the channel-on-sublane layout IS NCHW, so no
    # transposes are needed on the way out.
    h_next = h_out[:, :, :M].reshape(B, hidden, H, W)
    c_next = c_out[:, :, :M].reshape(B, hidden, H, W)
    return h_next, c_next

    # TODO(synk): in a recurrent rollout, emit h in bf16 and build the im2col
    # slab incrementally so the per-step pad/concat happens once per sequence.


if __name__ == "__main__":
    # Module config: ConvLSTMCell(input_dim=4, hidden_dim=32, kernel_size=(3,3), bias=True)
    B, Cin, H, W = 2, 4, 16, 16
    hidden = 32
    KH, KW = 3, 3

    key = jax.random.PRNGKey(0)
    k1, k2, k3, k4 = jax.random.split(key, 4)
    x = jax.random.normal(k1, (B, Cin, H, W), jnp.float32)
    h0 = jax.random.normal(k2, (B, hidden, H, W), jnp.float32)
    c0 = jax.random.normal(k3, (B, hidden, H, W), jnp.float32)

    # Parameter init mirroring the module: weight ~ N(0, 0.01), bias = 0.
    weight = 0.01 * jax.random.normal(
        k4, (4 * hidden, Cin + hidden, KH, KW), jnp.float32)
    bias = jnp.zeros((4 * hidden,), jnp.float32)

    h1, c1 = convlstm_cell(x, h0, c0, weight, bias, (KH, KW))
    jax.block_until_ready((h1, c1))

    # Pure-JAX reference of the PyTorch forward.  The reference conv runs on
    # the same bf16-rounded operands with f32 accumulation so tolerances stay
    # tight (the kernel's conv precision is configurable via compute_dtype).
    comb = jnp.concatenate([x, h0], axis=1)
    conv = jax.lax.conv_general_dilated(
        comb.astype(jnp.bfloat16), weight.astype(jnp.bfloat16),
        window_strides=(1, 1),
        padding=((KH // 2, KH // 2), (KW // 2, KW // 2)),
        dimension_numbers=("NCHW", "OIHW", "NCHW"),
        preferred_element_type=jnp.float32)
    conv = conv + bias[None, :, None, None]
    cc_i, cc_f, cc_o, cc_g = jnp.split(conv, 4, axis=1)
    i_g = jax.nn.sigmoid(cc_i)
    f_g = jax.nn.sigmoid(cc_f)
    o_g = jax.nn.sigmoid(cc_o)
    g_g = jnp.tanh(cc_g)
    c_ref = f_g * c0 + i_g * g_g
    h_ref = o_g * jnp.tanh(c_ref)

    assert jnp.allclose(h1, h_ref, atol=5e-3, rtol=5e-3), "h_next mismatch"
    assert jnp.allclose(c1, c_ref, atol=5e-3, rtol=5e-3), "c_next mismatch"

    # TODO(synk): retain_grad()/autograd bookkeeping has no Pallas equivalent
    # (forward-only kernel).
    print("KERNEL_OK")
</pallas_src>

<mosaic_0001>
module attributes {stable_mosaic.version = 11 : i64} {
  func.func @convlstm_cell_kernel(%arg0: i32, %arg1: i32, %arg2: memref<128x384xbf16, #tpu.memory_space<vmem>>, %arg3: memref<128x1xf32, #tpu.memory_space<vmem>>, %arg4: memref<128x1xf32, #tpu.memory_space<vmem>>, %arg5: memref<128x1xf32, #tpu.memory_space<vmem>>, %arg6: memref<1x384x128xbf16, #tpu.memory_space<vmem>>, %arg7: memref<1x32x128xf32, #tpu.memory_space<vmem>>, %arg8: memref<1x32x128xf32, #tpu.memory_space<vmem>>, %arg9: memref<1x32x128xf32, #tpu.memory_space<vmem>>) attributes {dimension_semantics = [#tpu.dimension_semantics<parallel>, #tpu.dimension_semantics<parallel>], iteration_bounds = array<i64: 2, 2>, scalar_prefetch = 0 : i64, scratch_operands = 0 : i64, tpu.core_type = #tpu.core_type<tc>, window_params = [{pipeline_mode = #tpu.pipeline_mode<synchronous>, transform_indices = @transform_0, window_bounds = array<i64: 128, 384>}, {pipeline_mode = #tpu.pipeline_mode<synchronous>, transform_indices = @transform_1, window_bounds = array<i64: 128, 1>}, {pipeline_mode = #tpu.pipeline_mode<synchronous>, transform_indices = @transform_2, window_bounds = array<i64: 128, 1>}, {pipeline_mode = #tpu.pipeline_mode<synchronous>, transform_indices = @transform_3, window_bounds = array<i64: 128, 1>}, {transform_indices = @transform_4, window_bounds = array<i64: 1, 384, 128>}, {transform_indices = @transform_5, window_bounds = array<i64: 1, 32, 128>}, {transform_indices = @transform_6, window_bounds = array<i64: 1, 32, 128>}, {transform_indices = @transform_7, window_bounds = array<i64: 1, 32, 128>}]} {
    %c0 = arith.constant 0 : index
    %c0_0 = arith.constant 0 : index
    %0 = vector.load %arg2[%c0, %c0_0] : memref<128x384xbf16, #tpu.memory_space<vmem>>, vector<128x384xbf16>
    %c0_1 = arith.constant 0 : index
    %c0_2 = arith.constant 0 : index
    %c0_3 = arith.constant 0 : index
    %1 = vector.load %arg6[%c0_1, %c0_2, %c0_3] : memref<1x384x128xbf16, #tpu.memory_space<vmem>>, vector<1x384x128xbf16>
    %2 = vector.shape_cast %1 : vector<1x384x128xbf16> to vector<384x128xbf16>
    %cst = arith.constant dense<0.000000e+00> : vector<128x128xf32>
    %3 = tpu.matmul %0, %2, %cst {dimension_numbers = #tpu.dot_dimension_numbers<[1], [0], [0], [1], [0, 0, 1, 1], [], []>} : vector<128x384xbf16>, vector<384x128xbf16>, vector<128x128xf32> -> vector<128x128xf32>
    %c0_4 = arith.constant 0 : index
    %c0_5 = arith.constant 0 : index
    %4 = vector.load %arg3[%c0_4, %c0_5] : memref<128x1xf32, #tpu.memory_space<vmem>>, vector<128x1xf32>
    %5 = vector.broadcast %4 : vector<128x1xf32> to vector<128x128xf32>
    %6 = arith.addf %3, %5 : vector<128x128xf32>
    %7 = math.tanh %6 : vector<128x128xf32>
    %c0_6 = arith.constant 0 : index
    %c0_7 = arith.constant 0 : index
    %8 = vector.load %arg4[%c0_6, %c0_7] : memref<128x1xf32, #tpu.memory_space<vmem>>, vector<128x1xf32>
    %9 = vector.broadcast %8 : vector<128x1xf32> to vector<128x128xf32>
    %10 = arith.mulf %7, %9 : vector<128x128xf32>
    %c0_8 = arith.constant 0 : index
    %c0_9 = arith.constant 0 : index
    %11 = vector.load %arg5[%c0_8, %c0_9] : memref<128x1xf32, #tpu.memory_space<vmem>>, vector<128x1xf32>
    %12 = vector.broadcast %11 : vector<128x1xf32> to vector<128x128xf32>
    %13 = arith.addf %10, %12 : vector<128x128xf32>
    %14 = vector.extract_strided_slice %13 {offsets = [0, 0], sizes = [32, 128], strides = [1, 1]} : vector<128x128xf32> to vector<32x128xf32>
    %15 = vector.extract_strided_slice %13 {offsets = [32, 0], sizes = [32, 128], strides = [1, 1]} : vector<128x128xf32> to vector<32x128xf32>
    %16 = vector.extract_strided_slice %13 {offsets = [64, 0], sizes = [32, 128], strides = [1, 1]} : vector<128x128xf32> to vector<32x128xf32>
    %17 = vector.extract_strided_slice %13 {offsets = [96, 0], sizes = [32, 128], strides = [1, 1]} : vector<128x128xf32> to vector<32x128xf32>
    %c0_10 = arith.constant 0 : index
    %c0_11 = arith.constant 0 : index
    %c0_12 = arith.constant 0 : index
    %18 = vector.load %arg7[%c0_10, %c0_11, %c0_12] : memref<1x32x128xf32, #tpu.memory_space<vmem>>, vector<1x32x128xf32>
    %19 = vector.shape_cast %18 : vector<1x32x128xf32> to vector<32x128xf32>
    %20 = arith.mulf %15, %19 : vector<32x128xf32>
    %21 = arith.mulf %14, %17 : vector<32x128xf32>
    %22 = arith.addf %20, %21 : vector<32x128xf32>
    %c0_13 = arith.constant 0 : index
    %c0_14 = arith.constant 0 : index
    %c0_15 = arith.constant 0 : index
    %23 = vector.load %arg9[%c0_13, %c0_14, %c0_15] : memref<1x32x128xf32, #tpu.memory_space<vmem>>, vector<1x32x128xf32>
    %24 = vector.shape_cast %23 : vector<1x32x128xf32> to vector<32x128xf32>
    %25 = vector.shape_cast %22 : vector<32x128xf32> to vector<1x32x128xf32>
    tpu.vector_store %arg9[%c0_13, %c0_14, %c0_15], %25 {strides = array<i32>} : memref<1x32x128xf32, #tpu.memory_space<vmem>>, vector<1x32x128xf32>,
    %26 = math.tanh %22 : vector<32x128xf32>
    %27 = arith.mulf %16, %26 : vector<32x128xf32>
    %c0_16 = arith.constant 0 : index
    %c0_17 = arith.constant 0 : index
    %c0_18 = arith.constant 0 : index
    %28 = vector.load %arg8[%c0_16, %c0_17, %c0_18] : memref<1x32x128xf32, #tpu.memory_space<vmem>>, vector<1x32x128xf32>
    %29 = vector.shape_cast %28 : vector<1x32x128xf32> to vector<32x128xf32>
    %30 = vector.shape_cast %27 : vector<32x128xf32> to vector<1x32x128xf32>
    tpu.vector_store %arg8[%c0_16, %c0_17, %c0_18], %30 {strides = array<i32>} : memref<1x32x128xf32, #tpu.memory_space<vmem>>, vector<1x32x128xf32>,
    return
  }
  func.func @transform_0(%arg0: i32, %arg1: i32) -> (i32, i32) {
    %c0_i32 = arith.constant 0 : i32
    %c0_i32_0 = arith.constant 0 : i32
    %c0_i32_1 = arith.constant 0 : i32
    return %c0_i32, %c0_i32_0 : i32, i32
  }
  func.func @transform_1(%arg0: i32, %arg1: i32) -> (i32, i32) {
    %c0_i32 = arith.constant 0 : i32
    %c0_i32_0 = arith.constant 0 : i32
    %c0_i32_1 = arith.constant 0 : i32
    return %c0_i32, %c0_i32_0 : i32, i32
  }
  func.func @transform_2(%arg0: i32, %arg1: i32) -> (i32, i32) {
    %c0_i32 = arith.constant 0 : i32
    %c0_i32_0 = arith.constant 0 : i32
    %c0_i32_1 = arith.constant 0 : i32
    return %c0_i32, %c0_i32_0 : i32, i32
  }
  func.func @transform_3(%arg0: i32, %arg1: i32) -> (i32, i32) {
    %c0_i32 = arith.constant 0 : i32
    %c0_i32_0 = arith.constant 0 : i32
    %c0_i32_1 = arith.constant 0 : i32
    return %c0_i32, %c0_i32_0 : i32, i32
  }
  func.func @transform_4(%arg0: i32, %arg1: i32) -> (i32, i32, i32) {
    %c0_i32 = arith.constant 0 : i32
    %c0_i32_0 = arith.constant 0 : i32
    return %arg0, %c0_i32, %arg1 : i32, i32, i32
  }
  func.func @transform_5(%arg0: i32, %arg1: i32) -> (i32, i32, i32) {
    %c0_i32 = arith.constant 0 : i32
    %c0_i32_0 = arith.constant 0 : i32
    return %arg0, %c0_i32, %arg1 : i32, i32, i32
  }
  func.func @transform_6(%arg0: i32, %arg1: i32) -> (i32, i32, i32) {
    %c0_i32 = arith.constant 0 : i32
    %c0_i32_0 = arith.constant 0 : i32
    return %arg0, %c0_i32, %arg1 : i32, i32, i32
  }
  func.func @transform_7(%arg0: i32, %arg1: i32) -> (i32, i32, i32) {
    %c0_i32 = arith.constant 0 : i32
    %c0_i32_0 = arith.constant 0 : i32
    return %arg0, %c0_i32, %arg1 : i32, i32, i32
  }
}

</mosaic_0001>

<llo_original>
// kernel: tpu_custom_call.1
$region0: #{tpu_custom_call.1}
  #allocation0 [shape = 'u32[]', space=smem, size = 0x4, offset = 0x4, fixed_abs, tag = 'smem constant byte address 0x4 - core index']
  #allocation1 [shape = 'u32[144,128]{1,0:T(1,128)}', space=vmem, size = 0x12000, scoped, tag = 'internal scratch']
  %s0 = inlined_call_operand.vmem [shape: bf16[128,384], index: 0, kind: input, shape index: {}]
  %s1 = inlined_call_operand.vmem [shape: f32[128,1], index: 1, kind: input, shape index: {}]
  %s2 = inlined_call_operand.vmem [shape: f32[128,1], index: 2, kind: input, shape index: {}]
  %s3 = inlined_call_operand.vmem [shape: f32[128,1], index: 3, kind: input, shape index: {}]
  %s4 = inlined_call_operand.hbm [shape: bf16[2,384,256], index: 4, kind: input, shape index: {}]
  %s5 = inlined_call_operand.vmem [shape: f32[2,32,256], index: 5, kind: input, shape index: {}]
  %s6 = inlined_call_operand.hbm [shape: f32[2,32,256], index: 6, kind: output, shape index: {0}]
  %s7 = inlined_call_operand.hbm [shape: f32[2,32,256], index: 7, kind: output, shape index: {1}]
  %8 = xla_tuple %s6, %s7
  %s9 = sld [smem:[#allocation0]]
  $region107: #{tpu_custom_call.1} parent=0
    _
  %s11 = ssub.s32 1, %s9
  %s12 = scalar_select 0, %s11, %s9
  $region1: #{tpu_custom_call.1} parent=0
    #allocation2 [shape = 'u8[196608]{0}', space=vmem, size = 0x30000, scoped, tag = 'input window, operand 4']
    #allocation3 [shape = 's32[2]{0}', space=sflag, size = 0x8, scoped, tag = 'scoped memory for tpu_custom_call.1']
    #allocation4 [shape = 's32[2]{0}', space=sflag, size = 0x8, scoped, tag = 'scoped memory for tpu_custom_call.1']
    #allocation5 [shape = 'u8[32768]{0}', space=vmem, size = 0x8000, scoped, tag = 'input window, operand 5']
    #allocation6 [shape = 'u8[32768]{0}', space=vmem, size = 0x8000, scoped, tag = 'output window, operand 0']
    #allocation7 [shape = 'u8[32768]{0}', space=vmem, size = 0x8000, scoped, tag = 'output window, operand 1']
    #allocation8 [shape = 's32[2]{0}', space=sflag, size = 0x8, scoped, tag = 'scoped memory for tpu_custom_call.1']
    %13 = vsyncpa [#allocation3], 0
    %s14 = scalar_lea.sflag [#allocation3], 1
    %15 = vsyncpa %s14, 0
    %16 = vsyncpa [#allocation4], 0
    %s17 = scalar_lea.sflag [#allocation4], 1
    %18 = vsyncpa %s17, 0
    %19 = vsyncpa [#allocation8], 0
    %s20 = scalar_lea.sflag [#allocation8], 1
    %21 = vsyncpa %s20, 0
    loop: start=0, step=1, limit=6
    $region2: #{tpu_custom_call.1} parent=1 // loop_pre_header
      _
    $region3: #{tpu_custom_call.1} parent=1 // loop_header
      %s23 = sphi 0, %s27
      %p24 = scmp.ge.s32.totalorder %s23, 6
      %s30 = sphi 0, %s42
      %s31 = sphi 0, %s38
      %s32 = sphi 0, %s30
      %s33 = sphi 0, %s31
      %s34 = sphi 0, %s32
      %s35 = sphi 0, %s33
      %s43 = sphi 0, %s43
      %s45 = sphi 0, %s43
      %s46 = sphi 0, %s45
      %s60 = sphi 0, %s46
      %s64 = sphi 0, %s64
      %s66 = sphi 0, %s64
      %s67 = sphi 0, %s66
      %s81 = sphi 0, %s67
      %s85 = sphi 0, %s85
      %s87 = sphi 0, %s85
      %s88 = sphi 0, %s87
      %s102 = sphi 0, %s88
      %s106 = sphi 0, %s106
      %s108 = sphi 0, %s106
      %s109 = sphi 0, %s108
      %s123 = sphi 0, %s109
      %s131 = sphi 0, %s133
      %s134 = sphi 0, %s131
      %s135 = sphi 0, %s134
      %s151 = sphi 0, %s135
      %s159 = sphi 0, %s161
      %s162 = sphi 0, %s159
      %s163 = sphi 0, %s162
      %s179 = sphi 0, %s163
      %s187 = sphi 0, %s189
      %s190 = sphi 0, %s187
      %s191 = sphi 0, %s190
      %s207 = sphi 0, %s191
      %s215 = sphi 0, %s217
      %s218 = sphi 0, %s215
      %s219 = sphi 0, %s218
      %s235 = sphi 0, %s219
    $region4: #{tpu_custom_call.1} parent=1 // loop_header_branch
      %26 = sbr.rel (%p24) target = $region8
    $region5: #{tpu_custom_call.1} parent=1 // loop_body
      %s28 = ssub.s32 %s23, 1
      %s29 = ssub.s32 %s23, 2
      %s36 = sadd.s32 1, %s31
      %p37 = scmp.ge.s32.totalorder %s36, 2
      %s38 = scalar_select %p37, 0, %s36
      %s39 = sadd.s32 1, %s30
      %s40 = scalar_select %p37, %s39, %s30
      %p41 = scmp.ge.s32.totalorder %s40, 2
      %s42 = scalar_select %p41, 0, %s40
      %s44 = sadd.s32 %s43, 1
      %p47 = scmp.eq.s32.totalorder %s23, 3
      %p48 = scmp.ne.s32.totalorder %s43, %s45
      %p49 = scmp.eq.s32.totalorder %s23, 0
      %p50 = por %p48, %p49
      %p51 = scmp.ne.s32.totalorder %s43, %s45
      %p52 = scmp.eq.s32.totalorder %s28, 3
      %p53 = por %p51, %p52
      %p54 = scmp.ne.s32.totalorder %s45, %s46
      %p55 = scmp.eq.s32.totalorder %s28, 0
      %p56 = por %p54, %p55
      %p57 = scmp.ne.s32.totalorder %s45, %s46
      %p58 = scmp.eq.s32.totalorder %s29, 3
      %p59 = por %p57, %p58
      %p61 = scmp.ne.s32.totalorder %s46, %s60
      %p62 = scmp.eq.s32.totalorder %s29, 0
      %p63 = por %p61, %p62
      %s65 = sadd.s32 %s64, 1
      %p68 = scmp.eq.s32.totalorder %s23, 3
      %p69 = scmp.ne.s32.totalorder %s64, %s66
      %p70 = scmp.eq.s32.totalorder %s23, 0
      %p71 = por %p69, %p70
      %p72 = scmp.ne.s32.totalorder %s64, %s66
      %p73 = scmp.eq.s32.totalorder %s28, 3
      %p74 = por %p72, %p73
      %p75 = scmp.ne.s32.totalorder %s66, %s67
      %p76 = scmp.eq.s32.totalorder %s28, 0
      %p77 = por %p75, %p76
      %p78 = scmp.ne.s32.totalorder %s66, %s67
      %p79 = scmp.eq.s32.totalorder %s29, 3
      %p80 = por %p78, %p79
      %p82 = scmp.ne.s32.totalorder %s67, %s81
      %p83 = scmp.eq.s32.totalorder %s29, 0
      %p84 = por %p82, %p83
      %s86 = sadd.s32 %s85, 1
      %p89 = scmp.eq.s32.totalorder %s23, 3
      %p90 = scmp.ne.s32.totalorder %s85, %s87
      %p91 = scmp.eq.s32.totalorder %s23, 0
      %p92 = por %p90, %p91
      %p93 = scmp.ne.s32.totalorder %s85, %s87
      %p94 = scmp.eq.s32.totalorder %s28, 3
      %p95 = por %p93, %p94
      %p96 = scmp.ne.s32.totalorder %s87, %s88
      %p97 = scmp.eq.s32.totalorder %s28, 0
      %p98 = por %p96, %p97
      %p99 = scmp.ne.s32.totalorder %s87, %s88
      %p100 = scmp.eq.s32.totalorder %s29, 3
      %p101 = por %p99, %p100
      %p103 = scmp.ne.s32.totalorder %s88, %s102
      %p104 = scmp.eq.s32.totalorder %s29, 0
      %p105 = por %p103, %p104
      %s107 = sadd.s32 %s106, 1
      %p110 = scmp.eq.s32.totalorder %s23, 3
      %p111 = scmp.ne.s32.totalorder %s106, %s108
      %p112 = scmp.eq.s32.totalorder %s23, 0
      %p113 = por %p111, %p112
      %p114 = scmp.ne.s32.totalorder %s106, %s108
      %p115 = scmp.eq.s32.totalorder %s28, 3
      %p116 = por %p114, %p115
      %p117 = scmp.ne.s32.totalorder %s108, %s109
      %p118 = scmp.eq.s32.totalorder %s28, 0
      %p119 = por %p117, %p118
      %p120 = scmp.ne.s32.totalorder %s108, %s109
      %p121 = scmp.eq.s32.totalorder %s29, 3
      %p122 = por %p120, %p121
      %p124 = scmp.ne.s32.totalorder %s109, %s123
      %p125 = scmp.eq.s32.totalorder %s29, 0
      %p126 = por %p124, %p125
      %s127 = ssub.s32 %s30, %s42
      %s128 = ssub.s32 %s31, %s38
      %s129 = sor.u32 %s127, %s128
      %p130 = scmp.eq.s32.totalorder %s129, 0
      %s132 = sadd.s32 %s131, 1
      %s133 = scalar_select %p130, %s131, %s132
      %p136 = pneg %p130
      %p137 = scmp.eq.s32.totalorder %s23, 3
      %p138 = por %p136, %p137
      %p139 = scmp.ne.s32.totalorder %s131, %s134
      %p140 = scmp.eq.s32.totalorder %s23, 0
      %p141 = por %p139, %p140
      %p142 = scmp.ne.s32.totalorder %s131, %s134
      %p143 = scmp.eq.s32.totalorder %s28, 3
      %p144 = por %p142, %p143
      %p145 = scmp.ne.s32.totalorder %s134, %s135
      %p146 = scmp.eq.s32.totalorder %s28, 0
      %p147 = por %p145, %p146
      %p148 = scmp.ne.s32.totalorder %s134, %s135
      %p149 = scmp.eq.s32.totalorder %s29, 3
      %p150 = por %p148, %p149
      %p152 = scmp.ne.s32.totalorder %s135, %s151
      %p153 = scmp.eq.s32.totalorder %s29, 0
      %p154 = por %p152, %p153
      %s155 = ssub.s32 %s30, %s42
      %s156 = ssub.s32 %s31, %s38
      %s157 = sor.u32 %s155, %s156
      %p158 = scmp.eq.s32.totalorder %s157, 0
      %s160 = sadd.s32 %s159, 1
      %s161 = scalar_select %p158, %s159, %s160
      %p164 = pneg %p158
      %p165 = scmp.eq.s32.totalorder %s23, 3
      %p166 = por %p164, %p165
      %p167 = scmp.ne.s32.totalorder %s159, %s162
      %p168 = scmp.eq.s32.totalorder %s23, 0
      %p169 = por %p167, %p168
      %p170 = scmp.ne.s32.totalorder %s159, %s162
      %p171 = scmp.eq.s32.totalorder %s28, 3
      %p172 = por %p170, %p171
      %p173 = scmp.ne.s32.totalorder %s162, %s163
      %p174 = scmp.eq.s32.totalorder %s28, 0
      %p175 = por %p173, %p174
      %p176 = scmp.ne.s32.totalorder %s162, %s163
      %p177 = scmp.eq.s32.totalorder %s29, 3
      %p178 = por %p176, %p177
      %p180 = scmp.ne.s32.totalorder %s163, %s179
      %p181 = scmp.eq.s32.totalorder %s29, 0
      %p182 = por %p180, %p181
      %s183 = ssub.s32 %s30, %s42
      %s184 = ssub.s32 %s31, %s38
      %s185 = sor.u32 %s183, %s184
      %p186 = scmp.eq.s32.totalorder %s185, 0
      %s188 = sadd.s32 %s187, 1
      %s189 = scalar_select %p186, %s187, %s188
      %p192 = pneg %p186
      %p193 = scmp.eq.s32.totalorder %s23, 3
      %p194 = por %p192, %p193
      %p195 = scmp.ne.s32.totalorder %s187, %s190
      %p196 = scmp.eq.s32.totalorder %s23, 0
      %p197 = por %p195, %p196
      %p198 = scmp.ne.s32.totalorder %s187, %s190
      %p199 = scmp.eq.s32.totalorder %s28, 3
      %p200 = por %p198, %p199
      %p201 = scmp.ne.s32.totalorder %s190, %s191
      %p202 = scmp.eq.s32.totalorder %s28, 0
      %p203 = por %p201, %p202
      %p204 = scmp.ne.s32.totalorder %s190, %s191
      %p205 = scmp.eq.s32.totalorder %s29, 3
      %p206 = por %p204, %p205
      %p208 = scmp.ne.s32.totalorder %s191, %s207
      %p209 = scmp.eq.s32.totalorder %s29, 0
      %p210 = por %p208, %p209
      %s211 = ssub.s32 %s30, %s42
      %s212 = ssub.s32 %s31, %s38
      %s213 = sor.u32 %s211, %s212
      %p214 = scmp.eq.s32.totalorder %s213, 0
      %s216 = sadd.s32 %s215, 1
      %s217 = scalar_select %p214, %s215, %s216
      %p220 = pneg %p214
      %p221 = scmp.eq.s32.totalorder %s23, 3
      %p222 = por %p220, %p221
      %p223 = scmp.ne.s32.totalorder %s215, %s218
      %p224 = scmp.eq.s32.totalorder %s23, 0
      %p225 = por %p223, %p224
      %p226 = scmp.ne.s32.totalorder %s215, %s218
      %p227 = scmp.eq.s32.totalorder %s28, 3
      %p228 = por %p226, %p227
      %p229 = scmp.ne.s32.totalorder %s218, %s219
      %p230 = scmp.eq.s32.totalorder %s28, 0
      %p231 = por %p229, %p230
      %p232 = scmp.ne.s32.totalorder %s218, %s219
      %p233 = scmp.eq.s32.totalorder %s29, 3
      %p234 = por %p232, %p233
      %p236 = scmp.ne.s32.totalorder %s219, %s235
      %p237 = scmp.eq.s32.totalorder %s29, 0
      %p238 = por %p236, %p237
      %p239 = scmp.le.s32.totalorder 1, %s23
      %p240 = scmp.lt.s32.totalorder %s23, 5
      %p241 = pnand %p239, %p240
      %p242 = pneg %p241
      // Predicated region
      $region9: #{tpu_custom_call.1} parent=5 // pred_check
        _
      $region10: #{tpu_custom_call.1} parent=5 // pred_check_branch
        %244 = sbr.rel (%p241) target = $region12
      $region11: #{tpu_custom_call.1} parent=5 // pred_region
        %s245 = ssub.s32 %s23, 1
        // Predicated region
        $region13: #{tpu_custom_call.1} parent=11 // pred_check
          %p246 = pneg %p56
        $region14: #{tpu_custom_call.1} parent=11 // pred_check_branch
          %248 = sbr.rel (%p246) target = $region16
        $region15: #{tpu_custom_call.1} parent=11 // pred_region
          _
        $region16: #{tpu_custom_call.1} parent=11 // pred_fallthru
          _
        // Predicated region
        $region17: #{tpu_custom_call.1} parent=11 // pred_check
          %p249 = pneg %p77
        $region18: #{tpu_custom_call.1} parent=11 // pred_check_branch
          %251 = sbr.rel (%p249) target = $region20
        $region19: #{tpu_custom_call.1} parent=11 // pred_region
          _
        $region20: #{tpu_custom_call.1} parent=11 // pred_fallthru
          _
        // Predicated region
        $region21: #{tpu_custom_call.1} parent=11 // pred_check
          %p252 = pneg %p98
        $region22: #{tpu_custom_call.1} parent=11 // pred_check_branch
          %254 = sbr.rel (%p252) target = $region24
        $region23: #{tpu_custom_call.1} parent=11 // pred_region
          _
        $region24: #{tpu_custom_call.1} parent=11 // pred_fallthru
          _
        // Predicated region
        $region25: #{tpu_custom_call.1} parent=11 // pred_check
          %p255 = pneg %p119
        $region26: #{tpu_custom_call.1} parent=11 // pred_check_branch
          %257 = sbr.rel (%p255) target = $region28
        $region27: #{tpu_custom_call.1} parent=11 // pred_region
          _
        $region28: #{tpu_custom_call.1} parent=11 // pred_fallthru
          _
      $region12: #{tpu_custom_call.1} parent=5 // pred_fallthru
        _
      %p258 = scmp.lt.s32.totalorder %s23, 4
      // Predicated region
      $region29: #{tpu_custom_call.1} parent=5 // pred_check
        %p259 = pneg %p258
      $region30: #{tpu_custom_call.1} parent=5 // pred_check_branch
        %261 = sbr.rel (%p259) target = $region32
      $region31: #{tpu_custom_call.1} parent=5 // pred_region
        // Predicated region
        $region33: #{tpu_custom_call.1} parent=31 // pred_check
          %p262 = pneg %p141
        $region34: #{tpu_custom_call.1} parent=31 // pred_check_branch
          %264 = sbr.rel (%p262) target = $region36
        $region35: #{tpu_custom_call.1} parent=31 // pred_region
          %s265 = sand.u32 %s131, 1
          %s266 = scalar_lea.sflag [#allocation3], %s265
          %s267 = sand.u32 %s131, 1
          %s268 = smul.addr %s267, 192
          %s269 = scalar_lea.vmem [#allocation2], %s268
          %s271 = ssub.s32 3072, 3072
          %272 = vsyncadd %s266, %s271
          %s273 = smul.addr %s30, 96
          %s274 = sadd.s32 %s31, %s273
          %s275 = smul.addr %s274, 64
          %s276 = scalar_lea.hbm %s4, %s275
          %s277 = sshll.u32 %s269, 4
          %s278 = int_to_ptr.vmem [resolvable:$true] %s277
          %283 = dma.hbm_to_vmem [thread:$0]  %s276, 3072, %s278, %s266, 128, 64, 4
        $region36: #{tpu_custom_call.1} parent=31 // pred_fallthru
          _
        // Predicated region
        $region37: #{tpu_custom_call.1} parent=31 // pred_check
          %p284 = pneg %p169
        $region38: #{tpu_custom_call.1} parent=31 // pred_check_branch
          %286 = sbr.rel (%p284) target = $region40
        $region39: #{tpu_custom_call.1} parent=31 // pred_region
          %s287 = sand.u32 %s159, 1
          %s288 = sand.u32 %s159, 1
          %s289 = smul.addr %s288, 32
          %s290 = scalar_lea.vmem [#allocation5], %s289
          %s291 = smul.addr %s30, 8
          %s292 = sadd.s32 %s31, %s291
          %s293 = smul.addr %s292, 8
          %s294 = scalar_lea.vmem %s5, %s293
          // Predicated region
          $region41: #{tpu_custom_call.1} parent=39 // pred_check
            _
          $region42: #{tpu_custom_call.1} parent=39 // pred_check_branch
            %296 = sbr.rel (0) target = $region44
          $region43: #{tpu_custom_call.1} parent=39 // pred_region
            // Predicated region
            $region45: #{tpu_custom_call.1} parent=43 // pred_check
              _
            $region46: #{tpu_custom_call.1} parent=43 // pred_check_branch
              %298 = sbr.rel (0) target = $region48
            $region47: #{tpu_custom_call.1} parent=43 // pred_region
              // Predicated region
              $region60: #{tpu_custom_call.1} parent=47 // pred_check
                _
              $region61: #{tpu_custom_call.1} parent=47 // pred_check_branch
                %319 = sbr.rel (0) target = $region63
              $region62: #{tpu_custom_call.1} parent=47 // pred_region
                loop: start=0, step=1, limit=1
                $region64: #{tpu_custom_call.1} parent=62 // loop_pre_header
                  _
                $region65: #{tpu_custom_call.1} parent=62 // loop_header
                  %s321 = sphi 0, %s325
                  %p322 = scmp.ge.s32.totalorder %s321, 1
                  %s326 = sphi %s294, %s294
                  %s327 = sphi %s290, %s290
                $region66: #{tpu_custom_call.1} parent=62 // loop_header_branch
                  %324 = sbr.rel (%p322) target = $region70
                $region67: #{tpu_custom_call.1} parent=62 // loop_body
                  %v328 = vld [vmem:[%s326] sm:$0xff]
                  %329 = vst [vmem:[%s327] sm:$0xff] %v328
                  %v330 = vld [vmem:[%s326 + $0x10] sm:$0xff]
                  %331 = vst [vmem:[%s327 + $0x8] sm:$0xff] %v330
                  %v332 = vld [vmem:[%s326 + $0x20] sm:$0xff]
                  %333 = vst [vmem:[%s327 + $0x10] sm:$0xff] %v332
                  %v334 = vld [vmem:[%s326 + $0x30] sm:$0xff]
                  %335 = vst [vmem:[%s327 + $0x18] sm:$0xff] %v334
                $region68: #{tpu_custom_call.1} parent=62 // loop_footer
                  %s325 = sadd.s32 1, %s321
                $region69: #{tpu_custom_call.1} parent=62 // loop_footer_branch
                  %320 = sbr.rel target = $region65
                $region70: #{tpu_custom_call.1} parent=62 // loop_exit
                  _
              $region63: #{tpu_custom_call.1} parent=47 // pred_fallthru
                _
              // Predicated region
              $region71: #{tpu_custom_call.1} parent=47 // pred_check
                _
              $region72: #{tpu_custom_call.1} parent=47 // pred_check_branch
                %337 = sbr.rel target = $region74
              $region73: #{tpu_custom_call.1} parent=47 // pred_region
                _
              $region74: #{tpu_custom_call.1} parent=47 // pred_fallthru
                _
            $region48: #{tpu_custom_call.1} parent=43 // pred_fallthru
              _
            // Predicated region
            $region49: #{tpu_custom_call.1} parent=43 // pred_check
              _
            $region50: #{tpu_custom_call.1} parent=43 // pred_check_branch
              %300 = sbr.rel target = $region52
            $region51: #{tpu_custom_call.1} parent=43 // pred_region
              loop: start=0, step=1, limit=1
              $region53: #{tpu_custom_call.1} parent=51 // loop_pre_header
                _
              $region54: #{tpu_custom_call.1} parent=51 // loop_header
                %s303 = sphi 0, %s307
                %p304 = scmp.ge.s32.totalorder %s303, 1
                %s308 = sphi %s294, %s294
                %s309 = sphi %s290, %s290
              $region55: #{tpu_custom_call.1} parent=51 // loop_header_branch
                %306 = sbr.rel (%p304) target = $region59
              $region56: #{tpu_custom_call.1} parent=51 // loop_body
                %v310 = vld [vmem:[%s308] sm:$0xff]
                %311 = vst [vmem:[%s309] sm:$0xff] %v310
                %v312 = vld [vmem:[%s308 + $0x10] sm:$0xff]
                %313 = vst [vmem:[%s309 + $0x8] sm:$0xff] %v312
                %v314 = vld [vmem:[%s308 + $0x20] sm:$0xff]
                %315 = vst [vmem:[%s309 + $0x10] sm:$0xff] %v314
                %v316 = vld [vmem:[%s308 + $0x30] sm:$0xff]
                %317 = vst [vmem:[%s309 + $0x18] sm:$0xff] %v316
              $region57: #{tpu_custom_call.1} parent=51 // loop_footer
                %s307 = sadd.s32 1, %s303
              $region58: #{tpu_custom_call.1} parent=51 // loop_footer_branch
                %302 = sbr.rel target = $region54
              $region59: #{tpu_custom_call.1} parent=51 // loop_exit
                _
            $region52: #{tpu_custom_call.1} parent=43 // pred_fallthru
              _
          $region44: #{tpu_custom_call.1} parent=39 // pred_fallthru
            _
          %338 = vnop
        $region40: #{tpu_custom_call.1} parent=31 // pred_fallthru
          _
      $region32: #{tpu_custom_call.1} parent=5 // pred_fallthru
        _
      %p339 = scmp.le.s32.totalorder 1, %s23
      %p340 = scmp.lt.s32.totalorder %s23, 5
      %p341 = pnand %p339, %p340
      %p342 = pneg %p341
      // Predicated region
      $region75: #{tpu_custom_call.1} parent=5 // pred_check
        _
      $region76: #{tpu_custom_call.1} parent=5 // pred_check_branch
        %344 = sbr.rel (%p341) target = $region78
      $region77: #{tpu_custom_call.1} parent=5 // pred_region
        %s345 = ssub.s32 %s23, 1
        %s346 = sand.u32 %s134, 1
        %s347 = scalar_lea.sflag [#allocation3], %s346
        %s348 = sand.u32 %s134, 1
        %s349 = smul.addr %s348, 192
        %s350 = scalar_lea.vmem [#allocation2], %s349
        // Predicated region
        $region79: #{tpu_custom_call.1} parent=77 // pred_check
          %p351 = pneg %p147
        $region80: #{tpu_custom_call.1} parent=77 // pred_check_branch
          %353 = sbr.rel (%p351) target = $region82
        $region81: #{tpu_custom_call.1} parent=77 // pred_region
          %354 = dma.done %s347, 3072
        $region82: #{tpu_custom_call.1} parent=77 // pred_fallthru
          _
        %s355 = sand.u32 %s162, 1
        %s356 = sand.u32 %s162, 1
        %s357 = smul.addr %s356, 32
        %s358 = scalar_lea.vmem [#allocation5], %s357
        // Predicated region
        $region83: #{tpu_custom_call.1} parent=77 // pred_check
          %p359 = pneg %p175
        $region84: #{tpu_custom_call.1} parent=77 // pred_check_branch
          %361 = sbr.rel (%p359) target = $region86
        $region85: #{tpu_custom_call.1} parent=77 // pred_region
          _
        $region86: #{tpu_custom_call.1} parent=77 // pred_fallthru
          _
        %p362 = pneg %p56
        %p363 = pneg %p53
        %p364 = pneg %p77
        %p365 = pneg %p74
        %p366 = pneg %p98
        %p367 = pneg %p95
        %p368 = pneg %p119
        %p369 = pneg %p116
        %s370 = sand.u32 %s134, 1
        %s371 = scalar_lea.sflag [#allocation3], %s370
        %s372 = sand.u32 %s134, 1
        %s373 = smul.addr %s372, 192
        %s374 = scalar_lea.vmem [#allocation2], %s373
        %p375 = pneg %p147
        %p376 = pneg %p144
        %s377 = sand.u32 %s162, 1
        %s378 = sand.u32 %s162, 1
        %s379 = smul.addr %s378, 32
        %s380 = scalar_lea.vmem [#allocation5], %s379
        %p381 = pneg %p175
        %p382 = pneg %p172
        %p383 = pneg %p203
        %p384 = pneg %p200
        %s385 = sand.u32 %s190, 1
        %s386 = scalar_lea.sflag [#allocation4], %s385
        %s387 = sand.u32 %s190, 1
        %s388 = smul.addr %s387, 32
        %s389 = scalar_lea.vmem [#allocation6], %s388
        %p390 = pneg %p231
        %p391 = pneg %p228
        %s392 = sand.u32 %s218, 1
        %s393 = scalar_lea.sflag [#allocation8], %s392
        %s394 = sand.u32 %s218, 1
        %s395 = smul.addr %s394, 32
        %s396 = scalar_lea.vmem [#allocation7], %s395
        %v398 = vld [vmem:[%s0] sm:$0xff]
        %v399 = vld [vmem:[%s0 + $0x8] sm:$0xf]
        %v400 = vld [vmem:[%s0 + $0xc] sm:$0xff]
        %v401 = vld [vmem:[%s0 + $0x14] sm:$0xf]
        %v402 = vld [vmem:[%s0 + $0x18] sm:$0xff]
        %v403 = vld [vmem:[%s0 + $0x20] sm:$0xf]
        %v404 = vld [vmem:[%s0 + $0x24] sm:$0xff]
        %v405 = vld [vmem:[%s0 + $0x2c] sm:$0xf]
        %v406 = vld [vmem:[%s0 + $0x30] sm:$0xff]
        %v407 = vld [vmem:[%s0 + $0x38] sm:$0xf]
        %v408 = vld [vmem:[%s0 + $0x3c] sm:$0xff]
        %v409 = vld [vmem:[%s0 + $0x44] sm:$0xf]
        %v410 = vld [vmem:[%s0 + $0x48] sm:$0xff]
        %v411 = vld [vmem:[%s0 + $0x50] sm:$0xf]
        %v412 = vld [vmem:[%s0 + $0x54] sm:$0xff]
        %v413 = vld [vmem:[%s0 + $0x5c] sm:$0xf]
        %v414 = vld [vmem:[%s0 + $0x60] sm:$0xff]
        %v415 = vld [vmem:[%s0 + $0x68] sm:$0xf]
        %v416 = vld [vmem:[%s0 + $0x6c] sm:$0xff]
        %v417 = vld [vmem:[%s0 + $0x74] sm:$0xf]
        %v418 = vld [vmem:[%s0 + $0x78] sm:$0xff]
        %v419 = vld [vmem:[%s0 + $0x80] sm:$0xf]
        %v420 = vld [vmem:[%s0 + $0x84] sm:$0xff]
        %v421 = vld [vmem:[%s0 + $0x8c] sm:$0xf]
        %v422 = vld [vmem:[%s0 + $0x90] sm:$0xff]
        %v423 = vld [vmem:[%s0 + $0x98] sm:$0xf]
        %v424 = vld [vmem:[%s0 + $0x9c] sm:$0xff]
        %v425 = vld [vmem:[%s0 + $0xa4] sm:$0xf]
        %v426 = vld [vmem:[%s0 + $0xa8] sm:$0xff]
        %v427 = vld [vmem:[%s0 + $0xb0] sm:$0xf]
        %v428 = vld [vmem:[%s0 + $0xb4] sm:$0xff]
        %v429 = vld [vmem:[%s0 + $0xbc] sm:$0xf]
        %v430 = vld [vmem:[%s350] sm:$0xf]
        %v431 = vld [vmem:[%s350 + $0x4] sm:$0xf]
        %v432 = vld [vmem:[%s350 + $0x8] sm:$0xf]
        %v433 = vld [vmem:[%s350 + $0xc] sm:$0xf]
        %v434 = vld [vmem:[%s350 + $0x10] sm:$0xf]
        %v435 = vld [vmem:[%s350 + $0x14] sm:$0xf]
        %v436 = vld [vmem:[%s350 + $0x18] sm:$0xf]
        %v437 = vld [vmem:[%s350 + $0x1c] sm:$0xf]
        %v438 = vld [vmem:[%s350 + $0x20] sm:$0xf]
        %v439 = vld [vmem:[%s350 + $0x24] sm:$0xf]
        %v440 = vld [vmem:[%s350 + $0x28] sm:$0xf]
        %v441 = vld [vmem:[%s350 + $0x2c] sm:$0xf]
        %v442 = vld [vmem:[%s350 + $0x30] sm:$0xf]
        %v443 = vld [vmem:[%s350 + $0x34] sm:$0xf]
        %v444 = vld [vmem:[%s350 + $0x38] sm:$0xf]
        %v445 = vld [vmem:[%s350 + $0x3c] sm:$0xf]
        %v446 = vld [vmem:[%s350 + $0x40] sm:$0xf]
        %v447 = vld [vmem:[%s350 + $0x44] sm:$0xf]
        %v448 = vld [vmem:[%s350 + $0x48] sm:$0xf]
        %v449 = vld [vmem:[%s350 + $0x4c] sm:$0xf]
        %v450 = vld [vmem:[%s350 + $0x50] sm:$0xf]
        %v451 = vld [vmem:[%s350 + $0x54] sm:$0xf]
        %v452 = vld [vmem:[%s350 + $0x58] sm:$0xf]
        %v453 = vld [vmem:[%s350 + $0x5c] sm:$0xf]
        %v454 = vld [vmem:[%s350 + $0x60] sm:$0xf]
        %v455 = vld [vmem:[%s350 + $0x64] sm:$0xf]
        %v456 = vld [vmem:[%s350 + $0x68] sm:$0xf]
        %v457 = vld [vmem:[%s350 + $0x6c] sm:$0xf]
        %v458 = vld [vmem:[%s350 + $0x70] sm:$0xf]
        %v459 = vld [vmem:[%s350 + $0x74] sm:$0xf]
        %v460 = vld [vmem:[%s350 + $0x78] sm:$0xf]
        %v461 = vld [vmem:[%s350 + $0x7c] sm:$0xf]
        %v462 = vld [vmem:[%s350 + $0x80] sm:$0xf]
        %v463 = vld [vmem:[%s350 + $0x84] sm:$0xf]
        %v464 = vld [vmem:[%s350 + $0x88] sm:$0xf]
        %v465 = vld [vmem:[%s350 + $0x8c] sm:$0xf]
        %v466 = vld [vmem:[%s350 + $0x90] sm:$0xf]
        %v467 = vld [vmem:[%s350 + $0x94] sm:$0xf]
        %v468 = vld [vmem:[%s350 + $0x98] sm:$0xf]
        %v469 = vld [vmem:[%s350 + $0x9c] sm:$0xf]
        %v470 = vld [vmem:[%s350 + $0xa0] sm:$0xf]
        %v471 = vld [vmem:[%s350 + $0xa4] sm:$0xf]
        %v472 = vld [vmem:[%s350 + $0xa8] sm:$0xf]
        %v473 = vld [vmem:[%s350 + $0xac] sm:$0xf]
        %v474 = vld [vmem:[%s350 + $0xb0] sm:$0xf]
        %v475 = vld [vmem:[%s350 + $0xb4] sm:$0xf]
        %v476 = vld [vmem:[%s350 + $0xb8] sm:$0xf]
        %v477 = vld [vmem:[%s350 + $0xbc] sm:$0xf]
        %v478 = vld [vmem:[%s1] sm:$0xff]
        %v479 = vld [vmem:[%s1 + $0x8] sm:$0xff]
        %v480 = vld [vmem:[%s1 + $0x10] sm:$0xff]
        %v481 = vld [vmem:[%s1 + $0x18] sm:$0xff]
        %v482 = vld [vmem:[%s1 + $0x20] sm:$0xff]
        %v483 = vld [vmem:[%s1 + $0x28] sm:$0xff]
        %v484 = vld [vmem:[%s1 + $0x30] sm:$0xff]
        %v485 = vld [vmem:[%s1 + $0x38] sm:$0xff]
        %v486 = vld [vmem:[%s1 + $0x40] sm:$0xff]
        %v487 = vld [vmem:[%s1 + $0x48] sm:$0xff]
        %v488 = vld [vmem:[%s1 + $0x50] sm:$0xff]
        %v489 = vld [vmem:[%s1 + $0x58] sm:$0xff]
        %v490 = vld [vmem:[%s1 + $0x60] sm:$0xff]
        %v491 = vld [vmem:[%s1 + $0x68] sm:$0xff]
        %v492 = vld [vmem:[%s1 + $0x70] sm:$0xff]
        %v493 = vld [vmem:[%s1 + $0x78] sm:$0xff]
        %495 = vset.pattern.permute.xlu0 0
        %496 = vperm.xlu0 %495, %v478
        %v497 = vpop.permute.xlu0 %496
        %500 = vset.pattern.permute.xlu0 0
        %501 = vperm.xlu0 %500, %v479
        %v502 = vpop.permute.xlu0 %501
        %505 = vset.pattern.permute.xlu0 0
        %506 = vperm.xlu0 %505, %v480
        %v507 = vpop.permute.xlu0 %506
        %510 = vset.pattern.permute.xlu0 0
        %511 = vperm.xlu0 %510, %v481
        %v512 = vpop.permute.xlu0 %511
        %515 = vset.pattern.permute.xlu0 0
        %516 = vperm.xlu0 %515, %v482
        %v517 = vpop.permute.xlu0 %516
        %520 = vset.pattern.permute.xlu0 0
        %521 = vperm.xlu0 %520, %v483
        %v522 = vpop.permute.xlu0 %521
        %525 = vset.pattern.permute.xlu0 0
        %526 = vperm.xlu0 %525, %v484
        %v527 = vpop.permute.xlu0 %526
        %530 = vset.pattern.permute.xlu0 0
        %531 = vperm.xlu0 %530, %v485
        %v532 = vpop.permute.xlu0 %531
        %535 = vset.pattern.permute.xlu0 0
        %536 = vperm.xlu0 %535, %v486
        %v537 = vpop.permute.xlu0 %536
        %540 = vset.pattern.permute.xlu0 0
        %541 = vperm.xlu0 %540, %v487
        %v542 = vpop.permute.xlu0 %541
        %545 = vset.pattern.permute.xlu0 0
        %546 = vperm.xlu0 %545, %v488
        %v547 = vpop.permute.xlu0 %546
        %550 = vset.pattern.permute.xlu0 0
        %551 = vperm.xlu0 %550, %v489
        %v552 = vpop.permute.xlu0 %551
        %555 = vset.pattern.permute.xlu0 0
        %556 = vperm.xlu0 %555, %v490
        %v557 = vpop.permute.xlu0 %556
        %560 = vset.pattern.permute.xlu0 0
        %561 = vperm.xlu0 %560, %v491
        %v562 = vpop.permute.xlu0 %561
        %565 = vset.pattern.permute.xlu0 0
        %566 = vperm.xlu0 %565, %v492
        %v567 = vpop.permute.xlu0 %566
        %570 = vset.pattern.permute.xlu0 0
        %571 = vperm.xlu0 %570, %v493
        %v572 = vpop.permute.xlu0 %571
        %v606 = vunpack.c.l.b16 %v398
        %v607 = vunpack.c.h.b16 %v398
        %v608 = vunpack.c.l.b16 %v399
        %v609 = vunpack.c.l.b16 %v400
        %v610 = vunpack.c.h.b16 %v400
        %v611 = vunpack.c.l.b16 %v401
        %v612 = vunpack.c.l.b16 %v402
        %v613 = vunpack.c.h.b16 %v402
        %v614 = vunpack.c.l.b16 %v403
        %v615 = vunpack.c.l.b16 %v404
        %v616 = vunpack.c.h.b16 %v404
        %v617 = vunpack.c.l.b16 %v405
        %v618 = vunpack.c.l.b16 %v406
        %v619 = vunpack.c.h.b16 %v406
        %v620 = vunpack.c.l.b16 %v407
        %v621 = vunpack.c.l.b16 %v408
        %v622 = vunpack.c.h.b16 %v408
        %v623 = vunpack.c.l.b16 %v409
        %v624 = vunpack.c.l.b16 %v410
        %v625 = vunpack.c.h.b16 %v410
        %v626 = vunpack.c.l.b16 %v411
        %v627 = vunpack.c.l.b16 %v412
        %v628 = vunpack.c.h.b16 %v412
        %v629 = vunpack.c.l.b16 %v413
        %v630 = vunpack.c.l.b16 %v414
        %v631 = vunpack.c.h.b16 %v414
        %v632 = vunpack.c.l.b16 %v415
        %v633 = vunpack.c.l.b16 %v416
        %v634 = vunpack.c.h.b16 %v416
        %v635 = vunpack.c.l.b16 %v417
        %v636 = vunpack.c.l.b16 %v418
        %v637 = vunpack.c.h.b16 %v418
        %v638 = vunpack.c.l.b16 %v419
        %v639 = vunpack.c.l.b16 %v420
        %v640 = vunpack.c.h.b16 %v420
        %v641 = vunpack.c.l.b16 %v421
        %v642 = vunpack.c.l.b16 %v422
        %v643 = vunpack.c.h.b16 %v422
        %v644 = vunpack.c.l.b16 %v423
        %v645 = vunpack.c.l.b16 %v424
        %v646 = vunpack.c.h.b16 %v424
        %v647 = vunpack.c.l.b16 %v425
        %v648 = vunpack.c.l.b16 %v426
        %v649 = vunpack.c.h.b16 %v426
        %v650 = vunpack.c.l.b16 %v427
        %v651 = vunpack.c.l.b16 %v428
        %v652 = vunpack.c.h.b16 %v428
        %v653 = vunpack.c.l.b16 %v429
        %v654 = vpack.c.b16 %v609, %v606
        %v655 = vpack.c.b16 %v610, %v607
        %v656 = vpack.c.b16 %v611, %v608
        %v657 = vpack.c.b16 %v615, %v612
        %v658 = vpack.c.b16 %v616, %v613
        %v659 = vpack.c.b16 %v617, %v614
        %v660 = vpack.c.b16 %v621, %v618
        %v661 = vpack.c.b16 %v622, %v619
        %v662 = vpack.c.b16 %v623, %v620
        %v663 = vpack.c.b16 %v627, %v624
        %v664 = vpack.c.b16 %v628, %v625
        %v665 = vpack.c.b16 %v629, %v626
        %v666 = vpack.c.b16 %v633, %v630
        %v667 = vpack.c.b16 %v634, %v631
        %v668 = vpack.c.b16 %v635, %v632
        %v669 = vpack.c.b16 %v639, %v636
        %v670 = vpack.c.b16 %v640, %v637
        %v671 = vpack.c.b16 %v641, %v638
        %v672 = vpack.c.b16 %v645, %v642
        %v673 = vpack.c.b16 %v646, %v643
        %v674 = vpack.c.b16 %v647, %v644
        %v675 = vpack.c.b16 %v651, %v648
        %v676 = vpack.c.b16 %v652, %v649
        %v677 = vpack.c.b16 %v653, %v650
        %v750 = vunpack.c.l.b16 %v430
        %v751 = vunpack.c.l.b16 %v431
        %v752 = vunpack.c.l.b16 %v432
        %v753 = vunpack.c.l.b16 %v433
        %v754 = vunpack.c.l.b16 %v434
        %v755 = vunpack.c.l.b16 %v435
        %v756 = vunpack.c.l.b16 %v436
        %v757 = vunpack.c.l.b16 %v437
        %v758 = vunpack.c.l.b16 %v438
        %v759 = vunpack.c.l.b16 %v439
        %v760 = vunpack.c.l.b16 %v440
        %v761 = vunpack.c.l.b16 %v441
        %v762 = vunpack.c.l.b16 %v442
        %v763 = vunpack.c.l.b16 %v443
        %v764 = vunpack.c.l.b16 %v444
        %v765 = vunpack.c.l.b16 %v445
        %v766 = vunpack.c.l.b16 %v446
        %v767 = vunpack.c.l.b16 %v447
        %v768 = vunpack.c.l.b16 %v448
        %v769 = vunpack.c.l.b16 %v449
        %v770 = vunpack.c.l.b16 %v450
        %v771 = vunpack.c.l.b16 %v451
        %v772 = vunpack.c.l.b16 %v452
        %v773 = vunpack.c.l.b16 %v453
        %v774 = vunpack.c.l.b16 %v454
        %v775 = vunpack.c.l.b16 %v455
        %v776 = vunpack.c.l.b16 %v456
        %v777 = vunpack.c.l.b16 %v457
        %v778 = vunpack.c.l.b16 %v458
        %v779 = vunpack.c.l.b16 %v459
        %v780 = vunpack.c.l.b16 %v460
        %v781 = vunpack.c.l.b16 %v461
        %v782 = vunpack.c.l.b16 %v462
        %v783 = vunpack.c.l.b16 %v463
        %v784 = vunpack.c.l.b16 %v464
        %v785 = vunpack.c.l.b16 %v465
        %v786 = vunpack.c.l.b16 %v466
        %v787 = vunpack.c.l.b16 %v467
        %v788 = vunpack.c.l.b16 %v468
        %v789 = vunpack.c.l.b16 %v469
        %v790 = vunpack.c.l.b16 %v470
        %v791 = vunpack.c.l.b16 %v471
        %v792 = vunpack.c.l.b16 %v472
        %v793 = vunpack.c.l.b16 %v473
        %v794 = vunpack.c.l.b16 %v474
        %v795 = vunpack.c.l.b16 %v475
        %v796 = vunpack.c.l.b16 %v476
        %v797 = vunpack.c.l.b16 %v477
        %v798 = vpack.c.b16 %v751, %v750
        %v799 = vpack.c.b16 %v753, %v752
        %v800 = vpack.c.b16 %v755, %v754
        %v801 = vpack.c.b16 %v757, %v756
        %v802 = vpack.c.b16 %v759, %v758
        %v803 = vpack.c.b16 %v761, %v760
        %v804 = vpack.c.b16 %v763, %v762
        %v805 = vpack.c.b16 %v765, %v764
        %v806 = vpack.c.b16 %v767, %v766
        %v807 = vpack.c.b16 %v769, %v768
        %v808 = vpack.c.b16 %v771, %v770
        %v809 = vpack.c.b16 %v773, %v772
        %v810 = vpack.c.b16 %v775, %v774
        %v811 = vpack.c.b16 %v777, %v776
        %v812 = vpack.c.b16 %v779, %v778
        %v813 = vpack.c.b16 %v781, %v780
        %v814 = vpack.c.b16 %v783, %v782
        %v815 = vpack.c.b16 %v785, %v784
        %v816 = vpack.c.b16 %v787, %v786
        %v817 = vpack.c.b16 %v789, %v788
        %v818 = vpack.c.b16 %v791, %v790
        %v819 = vpack.c.b16 %v793, %v792
        %v820 = vpack.c.b16 %v795, %v794
        %v821 = vpack.c.b16 %v797, %v796
        %846 = vmatprep.subr.bf16.mxu0 0
        %847 = vmatpush1.bf16.msra.mxu0 %v798
        %848 = vmatprep.subr.bf16.mxu0 0
        %849 = vmatpush1.bf16.msra.mxu0 %v799
        %850 = vmatprep.subr.bf16.mxu0 0
        %851 = vmatpush1.bf16.msra.mxu0 %v800
        %852 = vmatprep.subr.bf16.mxu0 0
        %853 = vmatpush1.bf16.msra.mxu0 %v801
        %854 = vmatprep.subr.bf16.mxu0 0
        %855 = vmatpush1.bf16.msra.mxu0 %v802
        %856 = vmatprep.subr.bf16.mxu0 0
        %857 = vmatpush1.bf16.msra.mxu0 %v803
        %858 = vmatprep.subr.bf16.mxu0 0
        %859 = vmatpush1.bf16.msra.mxu0 %v804
        %860 = vmatprep.subr.bf16.mxu0 0
        %861 = vmatpush1.bf16.msra.mxu0 %v805
        %862 = vmatprep.subr.bf16.mxu0 0
        %863 = vmatpush1.bf16.msra.mxu0 %v806
        %864 = vmatprep.subr.bf16.mxu0 0
        %865 = vmatpush1.bf16.msra.mxu0 %v807
        %866 = vmatprep.subr.bf16.mxu0 0
        %867 = vmatpush1.bf16.msra.mxu0 %v808
        %868 = vmatprep.subr.bf16.mxu0 0
        %869 = vmatpush1.bf16.msra.mxu0 %v809
        %870 = vmatprep.subr.bf16.mxu0 0
        %871 = vmatpush1.bf16.msra.mxu0 %v810
        %872 = vmatprep.subr.bf16.mxu0 0
        %873 = vmatpush1.bf16.msra.mxu0 %v811
        %874 = vmatprep.subr.bf16.mxu0 0
        %875 = vmatpush1.bf16.msra.mxu0 %v812
        %876 = vmatprep.subr.bf16.mxu0 0
        %877 = vmatpush1.bf16.msra.mxu0 %v813
        %878 = vmatprep.mubr.bf16.mxu0 %v655
        %879 = vmatmul.mubr.bf16.gmra.mrb[0].mxu0 %v654
        %v880 = vpop.f32.mrb[0].mxu0
        %v881 = vadd.f32 %v497, %v880
        %v882 = vpop.f32.mrb[0].mxu0
        %v883 = vpop.f32.mrb[0].mxu0
        %v884 = vadd.f32 %v502, %v883
        %v885 = vpop.f32.mrb[0].mxu0
        %886 = vmatprep.mubr.bf16.mxu0 %v658
        %887 = vmatmul.mubr.bf16.gmra.mrb[0].mxu0 %v657
        %v888 = vpop.f32.mrb[0].mxu0
        %v889 = vadd.f32 %v507, %v888
        %v890 = vpop.f32.mrb[0].mxu0
        %v891 = vpop.f32.mrb[0].mxu0
        %v892 = vadd.f32 %v512, %v891
        %v893 = vpop.f32.mrb[0].mxu0
        %894 = vmatprep.mubr.bf16.mxu0 %v661
        %895 = vmatmul.mubr.bf16.gmra.mrb[0].mxu0 %v660
        %v896 = vpop.f32.mrb[0].mxu0
        %v897 = vadd.f32 %v517, %v896
        %v898 = vpop.f32.mrb[0].mxu0
        %v899 = vpop.f32.mrb[0].mxu0
        %v900 = vadd.f32 %v522, %v899
        %v901 = vpop.f32.mrb[0].mxu0
        %902 = vmatprep.mubr.bf16.mxu0 %v664
        %903 = vmatmul.mubr.bf16.gmra.mrb[0].mxu0 %v663
        %v904 = vpop.f32.mrb[0].mxu0
        %v905 = vadd.f32 %v527, %v904
        %v906 = vpop.f32.mrb[0].mxu0
        %v907 = vpop.f32.mrb[0].mxu0
        %v908 = vadd.f32 %v532, %v907
        %v909 = vpop.f32.mrb[0].mxu0
        %910 = vmatprep.mubr.bf16.mxu0 %v667
        %911 = vmatmul.mubr.bf16.gmra.mrb[0].mxu0 %v666
        %v912 = vpop.f32.mrb[0].mxu0
        %v913 = vadd.f32 %v537, %v912
        %v914 = vpop.f32.mrb[0].mxu0
        %v915 = vpop.f32.mrb[0].mxu0
        %v916 = vadd.f32 %v542, %v915
        %v917 = vpop.f32.mrb[0].mxu0
        %918 = vmatprep.mubr.bf16.mxu0 %v670
        %919 = vmatmul.mubr.bf16.gmra.mrb[0].mxu0 %v669
        %v920 = vpop.f32.mrb[0].mxu0
        %v921 = vadd.f32 %v547, %v920
        %v922 = vpop.f32.mrb[0].mxu0
        %v923 = vpop.f32.mrb[0].mxu0
        %v924 = vadd.f32 %v552, %v923
        %v925 = vpop.f32.mrb[0].mxu0
        %926 = vmatprep.mubr.bf16.mxu0 %v673
        %927 = vmatmul.mubr.bf16.gmra.mrb[0].mxu0 %v672
        %v928 = vpop.f32.mrb[0].mxu0
        %v929 = vadd.f32 %v557, %v928
        %v930 = vpop.f32.mrb[0].mxu0
        %v931 = vpop.f32.mrb[0].mxu0
        %v932 = vadd.f32 %v562, %v931
        %v933 = vpop.f32.mrb[0].mxu0
        %934 = vmatprep.mubr.bf16.mxu0 %v676
        %935 = vmatmul.mubr.bf16.gmra.mrb[0].mxu0 %v675
        %v936 = vpop.f32.mrb[0].mxu0
        %v937 = vadd.f32 %v567, %v936
        %v938 = vpop.f32.mrb[0].mxu0
        %v939 = vpop.f32.mrb[0].mxu0
        %v940 = vadd.f32 %v572, %v939
        %v941 = vpop.f32.mrb[0].mxu0
        %942 = vdwg.mxu0
        %943 = vmatprep.subr.bf16.mxu0 0
        %944 = vmatpush1.bf16.msra.mxu0 %v814
        %945 = vmatprep.subr.bf16.mxu0 0
        %946 = vmatpush1.bf16.msra.mxu0 %v815
        %947 = vmatprep.subr.bf16.mxu0 0
        %948 = vmatpush1.bf16.msra.mxu0 %v816
        %949 = vmatprep.subr.bf16.mxu0 0
        %950 = vmatpush1.bf16.msra.mxu0 %v817
        %951 = vmatprep.subr.bf16.mxu0 0
        %952 = vmatpush1.bf16.msra.mxu0 %v818
        %953 = vmatprep.subr.bf16.mxu0 0
        %954 = vmatpush1.bf16.msra.mxu0 %v819
        %955 = vmatprep.subr.bf16.mxu0 0
        %956 = vmatpush1.bf16.msra.mxu0 %v820
        %957 = vmatprep.subr.bf16.mxu0 0
        %958 = vmatpush1.bf16.msra.mxu0 %v821
        %959 = vmatprep.subr.bf16.mxu0 0
        %960 = vmatpush1.bf16.msra.mxu0 0
        %961 = vmatprep.subr.bf16.mxu0 0
        %962 = vmatpush1.bf16.msra.mxu0 0
        %963 = vmatprep.subr.bf16.mxu0 0
        %964 = vmatpush1.bf16.msra.mxu0 0
        %965 = vmatprep.subr.bf16.mxu0 0
        %966 = vmatpush1.bf16.msra.mxu0 0
        %967 = vmatprep.subr.bf16.mxu0 0
        %968 = vmatpush1.bf16.msra.mxu0 0
        %969 = vmatprep.subr.bf16.mxu0 0
        %970 = vmatpush1.bf16.msra.mxu0 0
        %971 = vmatprep.subr.bf16.mxu0 0
        %972 = vmatpush1.bf16.msra.mxu0 0
        %973 = vmatprep.subr.bf16.mxu0 0
        %974 = vmatpush1.bf16.msra.mxu0 0
        %975 = vmatprep.mubr.bf16.mxu0 0
        %976 = vmatmul.mubr.bf16.gmra.mrb[0].mxu0 %v656
        %v977 = vpop.f32.mrb[0].mxu0
        %v978 = vadd.f32 %v881, %v977
        %v979 = vpop.f32.mrb[0].mxu0
        %v980 = vpop.f32.mrb[0].mxu0
        %v981 = vadd.f32 %v884, %v980
        %v982 = vpop.f32.mrb[0].mxu0
        %983 = vmatprep.mubr.bf16.mxu0 0
        %984 = vmatmul.mubr.bf16.gmra.mrb[0].mxu0 %v659
        %v985 = vpop.f32.mrb[0].mxu0
        %v986 = vadd.f32 %v889, %v985
        %v987 = vpop.f32.mrb[0].mxu0
        %v988 = vpop.f32.mrb[0].mxu0
        %v989 = vadd.f32 %v892, %v988
        %v990 = vpop.f32.mrb[0].mxu0
        %991 = vmatprep.mubr.bf16.mxu0 0
        %992 = vmatmul.mubr.bf16.gmra.mrb[0].mxu0 %v662
        %v993 = vpop.f32.mrb[0].mxu0
        %v994 = vadd.f32 %v897, %v993
        %v995 = vpop.f32.mrb[0].mxu0
        %v996 = vpop.f32.mrb[0].mxu0
        %v997 = vadd.f32 %v900, %v996
        %v998 = vpop.f32.mrb[0].mxu0
        %999 = vmatprep.mubr.bf16.mxu0 0
        %1000 = vmatmul.mubr.bf16.gmra.mrb[0].mxu0 %v665
        %v1001 = vpop.f32.mrb[0].mxu0
        %v1002 = vadd.f32 %v905, %v1001
        %v1003 = vpop.f32.mrb[0].mxu0
        %v1004 = vpop.f32.mrb[0].mxu0
        %v1005 = vadd.f32 %v908, %v1004
        %v1006 = vpop.f32.mrb[0].mxu0
        %1007 = vmatprep.mubr.bf16.mxu0 0
        %1008 = vmatmul.mubr.bf16.gmra.mrb[0].mxu0 %v668
        %v1009 = vpop.f32.mrb[0].mxu0
        %v1010 = vadd.f32 %v913, %v1009
        %v1011 = vpop.f32.mrb[0].mxu0
        %v1012 = vpop.f32.mrb[0].mxu0
        %v1013 = vadd.f32 %v916, %v1012
        %v1014 = vpop.f32.mrb[0].mxu0
        %1015 = vmatprep.mubr.bf16.mxu0 0
        %1016 = vmatmul.mubr.bf16.gmra.mrb[0].mxu0 %v671
        %v1017 = vpop.f32.mrb[0].mxu0
        %v1018 = vadd.f32 %v921, %v1017
        %v1019 = vpop.f32.mrb[0].mxu0
        %v1020 = vpop.f32.mrb[0].mxu0
        %v1021 = vadd.f32 %v924, %v1020
        %v1022 = vpop.f32.mrb[0].mxu0
        %1023 = vmatprep.mubr.bf16.mxu0 0
        %1024 = vmatmul.mubr.bf16.gmra.mrb[0].mxu0 %v674
        %v1025 = vpop.f32.mrb[0].mxu0
        %v1026 = vadd.f32 %v929, %v1025
        %v1027 = vpop.f32.mrb[0].mxu0
        %v1028 = vpop.f32.mrb[0].mxu0
        %v1029 = vadd.f32 %v932, %v1028
        %v1030 = vpop.f32.mrb[0].mxu0
        %1031 = vmatprep.mubr.bf16.mxu0 0
        %1032 = vmatmul.mubr.bf16.gmra.mrb[0].mxu0 %v677
        %v1033 = vpop.f32.mrb[0].mxu0
        %v1034 = vadd.f32 %v937, %v1033
        %v1035 = vpop.f32.mrb[0].mxu0
        %v1036 = vpop.f32.mrb[0].mxu0
        %v1037 = vadd.f32 %v940, %v1036
        %v1038 = vpop.f32.mrb[0].mxu0
        %1039 = vdwg.mxu0
        %v1040 = vtanh.pop %v978
        %v1041 = vtanh.pop %v981
        %v1042 = vtanh.pop %v986
        %v1043 = vtanh.pop %v989
        %v1044 = vtanh.pop %v994
        %v1045 = vtanh.pop %v997
        %v1046 = vtanh.pop %v1002
        %v1047 = vtanh.pop %v1005
        %v1048 = vtanh.pop %v1010
        %v1049 = vtanh.pop %v1013
        %v1050 = vtanh.pop %v1018
        %v1051 = vtanh.pop %v1021
        %v1052 = vtanh.pop %v1026
        %v1053 = vtanh.pop %v1029
        %v1054 = vtanh.pop %v1034
        %v1055 = vtanh.pop %v1037
        %v1056 = vld [vmem:[%s2] sm:$0xff]
        %v1057 = vld [vmem:[%s2 + $0x8] sm:$0xff]
        %v1058 = vld [vmem:[%s2 + $0x10] sm:$0xff]
        %v1059 = vld [vmem:[%s2 + $0x18] sm:$0xff]
        %v1060 = vld [vmem:[%s2 + $0x20] sm:$0xff]
        %v1061 = vld [vmem:[%s2 + $0x28] sm:$0xff]
        %v1062 = vld [vmem:[%s2 + $0x30] sm:$0xff]
        %v1063 = vld [vmem:[%s2 + $0x38] sm:$0xff]
        %v1064 = vld [vmem:[%s2 + $0x40] sm:$0xff]
        %v1065 = vld [vmem:[%s2 + $0x48] sm:$0xff]
        %v1066 = vld [vmem:[%s2 + $0x50] sm:$0xff]
        %v1067 = vld [vmem:[%s2 + $0x58] sm:$0xff]
        %v1068 = vld [vmem:[%s2 + $0x60] sm:$0xff]
        %v1069 = vld [vmem:[%s2 + $0x68] sm:$0xff]
        %v1070 = vld [vmem:[%s2 + $0x70] sm:$0xff]
        %v1071 = vld [vmem:[%s2 + $0x78] sm:$0xff]
        %1073 = vset.pattern.permute.xlu0 0
        %1074 = vperm.xlu0 %1073, %v1056
        %v1075 = vpop.permute.xlu0 %1074
        %1078 = vset.pattern.permute.xlu0 0
        %1079 = vperm.xlu0 %1078, %v1057
        %v1080 = vpop.permute.xlu0 %1079
        %1083 = vset.pattern.permute.xlu0 0
        %1084 = vperm.xlu0 %1083, %v1058
        %v1085 = vpop.permute.xlu0 %1084
        %1088 = vset.pattern.permute.xlu0 0
        %1089 = vperm.xlu0 %1088, %v1059
        %v1090 = vpop.permute.xlu0 %1089
        %1093 = vset.pattern.permute.xlu0 0
        %1094 = vperm.xlu0 %1093, %v1060
        %v1095 = vpop.permute.xlu0 %1094
        %1098 = vset.pattern.permute.xlu0 0
        %1099 = vperm.xlu0 %1098, %v1061
        %v1100 = vpop.permute.xlu0 %1099
        %1103 = vset.pattern.permute.xlu0 0
        %1104 = vperm.xlu0 %1103, %v1062
        %v1105 = vpop.permute.xlu0 %1104
        %1108 = vset.pattern.permute.xlu0 0
        %1109 = vperm.xlu0 %1108, %v1063
        %v1110 = vpop.permute.xlu0 %1109
        %1113 = vset.pattern.permute.xlu0 0
        %1114 = vperm.xlu0 %1113, %v1064
        %v1115 = vpop.permute.xlu0 %1114
        %1118 = vset.pattern.permute.xlu0 0
        %1119 = vperm.xlu0 %1118, %v1065
        %v1120 = vpop.permute.xlu0 %1119
        %1123 = vset.pattern.permute.xlu0 0
        %1124 = vperm.xlu0 %1123, %v1066
        %v1125 = vpop.permute.xlu0 %1124
        %1128 = vset.pattern.permute.xlu0 0
        %1129 = vperm.xlu0 %1128, %v1067
        %v1130 = vpop.permute.xlu0 %1129
        %1133 = vset.pattern.permute.xlu0 0
        %1134 = vperm.xlu0 %1133, %v1068
        %v1135 = vpop.permute.xlu0 %1134
        %1138 = vset.pattern.permute.xlu0 0
        %1139 = vperm.xlu0 %1138, %v1069
        %v1140 = vpop.permute.xlu0 %1139
        %1143 = vset.pattern.permute.xlu0 0
        %1144 = vperm.xlu0 %1143, %v1070
        %v1145 = vpop.permute.xlu0 %1144
        %1148 = vset.pattern.permute.xlu0 0
        %1149 = vperm.xlu0 %1148, %v1071
        %v1150 = vpop.permute.xlu0 %1149
        %v1152 = vmul.f32 %v1040, %v1075
        %v1153 = vmul.f32 %v1041, %v1080
        %v1154 = vmul.f32 %v1042, %v1085
        %v1155 = vmul.f32 %v1043, %v1090
        %v1156 = vmul.f32 %v1044, %v1095
        %v1157 = vmul.f32 %v1045, %v1100
        %v1158 = vmul.f32 %v1046, %v1105
        %v1159 = vmul.f32 %v1047, %v1110
        %v1160 = vmul.f32 %v1048, %v1115
        %v1161 = vmul.f32 %v1049, %v1120
        %v1162 = vmul.f32 %v1050, %v1125
        %v1163 = vmul.f32 %v1051, %v1130
        %v1164 = vmul.f32 %v1052, %v1135
        %v1165 = vmul.f32 %v1053, %v1140
        %v1166 = vmul.f32 %v1054, %v1145
        %v1167 = vmul.f32 %v1055, %v1150
        %v1168 = vld [vmem:[%s3] sm:$0xff]
        %v1169 = vld [vmem:[%s3 + $0x8] sm:$0xff]
        %v1170 = vld [vmem:[%s3 + $0x10] sm:$0xff]
        %v1171 = vld [vmem:[%s3 + $0x18] sm:$0xff]
        %v1172 = vld [vmem:[%s3 + $0x20] sm:$0xff]
        %v1173 = vld [vmem:[%s3 + $0x28] sm:$0xff]
        %v1174 = vld [vmem:[%s3 + $0x30] sm:$0xff]
        %v1175 = vld [vmem:[%s3 + $0x38] sm:$0xff]
        %v1176 = vld [vmem:[%s3 + $0x40] sm:$0xff]
        %v1177 = vld [vmem:[%s3 + $0x48] sm:$0xff]
        %v1178 = vld [vmem:[%s3 + $0x50] sm:$0xff]
        %v1179 = vld [vmem:[%s3 + $0x58] sm:$0xff]
        %v1180 = vld [vmem:[%s3 + $0x60] sm:$0xff]
        %v1181 = vld [vmem:[%s3 + $0x68] sm:$0xff]
        %v1182 = vld [vmem:[%s3 + $0x70] sm:$0xff]
        %v1183 = vld [vmem:[%s3 + $0x78] sm:$0xff]
        %1185 = vset.pattern.permute.xlu0 0
        %1186 = vperm.xlu0 %1185, %v1168
        %v1187 = vpop.permute.xlu0 %1186
        %1190 = vset.pattern.permute.xlu0 0
        %1191 = vperm.xlu0 %1190, %v1169
        %v1192 = vpop.permute.xlu0 %1191
        %1195 = vset.pattern.permute.xlu0 0
        %1196 = vperm.xlu0 %1195, %v1170
        %v1197 = vpop.permute.xlu0 %1196
        %1200 = vset.pattern.permute.xlu0 0
        %1201 = vperm.xlu0 %1200, %v1171
        %v1202 = vpop.permute.xlu0 %1201
        %1205 = vset.pattern.permute.xlu0 0
        %1206 = vperm.xlu0 %1205, %v1172
        %v1207 = vpop.permute.xlu0 %1206
        %1210 = vset.pattern.permute.xlu0 0
        %1211 = vperm.xlu0 %1210, %v1173
        %v1212 = vpop.permute.xlu0 %1211
        %1215 = vset.pattern.permute.xlu0 0
        %1216 = vperm.xlu0 %1215, %v1174
        %v1217 = vpop.permute.xlu0 %1216
        %1220 = vset.pattern.permute.xlu0 0
        %1221 = vperm.xlu0 %1220, %v1175
        %v1222 = vpop.permute.xlu0 %1221
        %1225 = vset.pattern.permute.xlu0 0
        %1226 = vperm.xlu0 %1225, %v1176
        %v1227 = vpop.permute.xlu0 %1226
        %1230 = vset.pattern.permute.xlu0 0
        %1231 = vperm.xlu0 %1230, %v1177
        %v1232 = vpop.permute.xlu0 %1231
        %1235 = vset.pattern.permute.xlu0 0
        %1236 = vperm.xlu0 %1235, %v1178
        %v1237 = vpop.permute.xlu0 %1236
        %1240 = vset.pattern.permute.xlu0 0
        %1241 = vperm.xlu0 %1240, %v1179
        %v1242 = vpop.permute.xlu0 %1241
        %1245 = vset.pattern.permute.xlu0 0
        %1246 = vperm.xlu0 %1245, %v1180
        %v1247 = vpop.permute.xlu0 %1246
        %1250 = vset.pattern.permute.xlu0 0
        %1251 = vperm.xlu0 %1250, %v1181
        %v1252 = vpop.permute.xlu0 %1251
        %1255 = vset.pattern.permute.xlu0 0
        %1256 = vperm.xlu0 %1255, %v1182
        %v1257 = vpop.permute.xlu0 %1256
        %1260 = vset.pattern.permute.xlu0 0
        %1261 = vperm.xlu0 %1260, %v1183
        %v1262 = vpop.permute.xlu0 %1261
        %v1264 = vadd.f32 %v1152, %v1187
        %v1265 = vadd.f32 %v1153, %v1192
        %v1266 = vadd.f32 %v1154, %v1197
        %v1267 = vadd.f32 %v1155, %v1202
        %v1268 = vadd.f32 %v1156, %v1207
        %v1269 = vadd.f32 %v1157, %v1212
        %v1270 = vadd.f32 %v1158, %v1217
        %v1271 = vadd.f32 %v1159, %v1222
        %v1272 = vadd.f32 %v1160, %v1227
        %v1273 = vadd.f32 %v1161, %v1232
        %v1274 = vadd.f32 %v1162, %v1237
        %v1275 = vadd.f32 %v1163, %v1242
        %v1276 = vadd.f32 %v1164, %v1247
        %v1277 = vadd.f32 %v1165, %v1252
        %v1278 = vadd.f32 %v1166, %v1257
        %v1279 = vadd.f32 %v1167, %v1262
        %v1280 = vld [vmem:[%s358] sm:$0xff]
        %v1281 = vld [vmem:[%s358 + $0x8] sm:$0xff]
        %v1282 = vld [vmem:[%s358 + $0x10] sm:$0xff]
        %v1283 = vld [vmem:[%s358 + $0x18] sm:$0xff]
        %v1284 = vmul.f32 %v1268, %v1280
        %v1285 = vmul.f32 %v1269, %v1281
        %v1286 = vmul.f32 %v1270, %v1282
        %v1287 = vmul.f32 %v1271, %v1283
        %v1288 = vmul.f32 %v1264, %v1276
        %v1289 = vmul.f32 %v1265, %v1277
        %v1290 = vmul.f32 %v1266, %v1278
        %v1291 = vmul.f32 %v1267, %v1279
        %v1292 = vadd.f32 %v1284, %v1288
        %v1293 = vadd.f32 %v1285, %v1289
        %v1294 = vadd.f32 %v1286, %v1290
        %v1295 = vadd.f32 %v1287, %v1291
        %1296 = vst [vmem:[%s396] sm:$0xff] %v1292
        %1297 = vst [vmem:[%s396 + $0x8] sm:$0xff] %v1293
        %1298 = vst [vmem:[%s396 + $0x10] sm:$0xff] %v1294
        %1299 = vst [vmem:[%s396 + $0x18] sm:$0xff] %v1295
        %v1300 = vtanh.pop %v1292
        %v1301 = vtanh.pop %v1293
        %v1302 = vtanh.pop %v1294
        %v1303 = vtanh.pop %v1295
        %v1304 = vmul.f32 %v1272, %v1300
        %v1305 = vmul.f32 %v1273, %v1301
        %v1306 = vmul.f32 %v1274, %v1302
        %v1307 = vmul.f32 %v1275, %v1303
        %1308 = vst [vmem:[%s389] sm:$0xff] %v1304
        %1309 = vst [vmem:[%s389 + $0x8] sm:$0xff] %v1305
        %1310 = vst [vmem:[%s389 + $0x10] sm:$0xff] %v1306
        %1311 = vst [vmem:[%s389 + $0x18] sm:$0xff] %v1307
        %s1312 = sand.u32 %s190, 1
        %s1313 = scalar_lea.sflag [#allocation4], %s1312
        %s1314 = sand.u32 %s190, 1
        %s1315 = smul.addr %s1314, 32
        %s1316 = scalar_lea.vmem [#allocation6], %s1315
        %s1317 = sand.u32 %s218, 1
        %s1318 = scalar_lea.sflag [#allocation8], %s1317
        %s1319 = sand.u32 %s218, 1
        %s1320 = smul.addr %s1319, 32
        %s1321 = scalar_lea.vmem [#allocation7], %s1320
        // Predicated region
        $region87: #{tpu_custom_call.1} parent=77 // pred_check
          %p1322 = pneg %p200
        $region88: #{tpu_custom_call.1} parent=77 // pred_check_branch
          %1324 = sbr.rel (%p1322) target = $region90
        $region89: #{tpu_custom_call.1} parent=77 // pred_region
          %s1326 = ssub.s32 512, 512
          %1327 = vsyncadd %s1313, %s1326
          %s1328 = smul.addr %s32, 8
          %s1329 = sadd.s32 %s33, %s1328
          %s1330 = smul.addr %s1329, 128
          %s1331 = scalar_lea.hbm %s6, %s1330
          %s1332 = sshll.u32 %s1316, 4
          %s1333 = int_to_ptr.vmem [resolvable:$true] %s1332
          %1338 = dma.vmem_to_hbm [thread:$0]  %s1333, 512, %s1331, %s1313, 128, 256, 8
        $region90: #{tpu_custom_call.1} parent=77 // pred_fallthru
          _
        // Predicated region
        $region91: #{tpu_custom_call.1} parent=77 // pred_check
          %p1339 = pneg %p228
        $region92: #{tpu_custom_call.1} parent=77 // pred_check_branch
          %1341 = sbr.rel (%p1339) target = $region94
        $region93: #{tpu_custom_call.1} parent=77 // pred_region
          %s1343 = ssub.s32 512, 512
          %1344 = vsyncadd %s1318, %s1343
          %s1345 = smul.addr %s32, 8
          %s1346 = sadd.s32 %s33, %s1345
          %s1347 = smul.addr %s1346, 128
          %s1348 = scalar_lea.hbm %s7, %s1347
          %s1349 = sshll.u32 %s1321, 4
          %s1350 = int_to_ptr.vmem [resolvable:$true] %s1349
          %1355 = dma.vmem_to_hbm [thread:$0]  %s1350, 512, %s1348, %s1318, 128, 256, 8
        $region94: #{tpu_custom_call.1} parent=77 // pred_fallthru
          _
      $region78: #{tpu_custom_call.1} parent=5 // pred_fallthru
        _
      %p1356 = scmp.le.s32.totalorder 2, %s23
      // Predicated region
      $region95: #{tpu_custom_call.1} parent=5 // pred_check
        %p1357 = pneg %p1356
      $region96: #{tpu_custom_call.1} parent=5 // pred_check_branch
        %1359 = sbr.rel (%p1357) target = $region98
      $region97: #{tpu_custom_call.1} parent=5 // pred_region
        %s1360 = ssub.s32 %s23, 2
        // Predicated region
        $region99: #{tpu_custom_call.1} parent=97 // pred_check
          %p1361 = pneg %p206
        $region100: #{tpu_custom_call.1} parent=97 // pred_check_branch
          %1363 = sbr.rel (%p1361) target = $region102
        $region101: #{tpu_custom_call.1} parent=97 // pred_region
          %s1364 = sand.u32 %s191, 1
          %s1365 = scalar_lea.sflag [#allocation4], %s1364
          %s1366 = sand.u32 %s191, 1
          %s1367 = smul.addr %s1366, 32
          %s1368 = scalar_lea.vmem [#allocation6], %s1367
          %1369 = dma.done %s1365, 512
        $region102: #{tpu_custom_call.1} parent=97 // pred_fallthru
          _
        // Predicated region
        $region103: #{tpu_custom_call.1} parent=97 // pred_check
          %p1370 = pneg %p234
        $region104: #{tpu_custom_call.1} parent=97 // pred_check_branch
          %1372 = sbr.rel (%p1370) target = $region106
        $region105: #{tpu_custom_call.1} parent=97 // pred_region
          %s1373 = sand.u32 %s219, 1
          %s1374 = scalar_lea.sflag [#allocation8], %s1373
          %s1375 = sand.u32 %s219, 1
          %s1376 = smul.addr %s1375, 32
          %s1377 = scalar_lea.vmem [#allocation7], %s1376
          %1378 = dma.done %s1374, 512
        $region106: #{tpu_custom_call.1} parent=97 // pred_fallthru
          _
      $region98: #{tpu_custom_call.1} parent=5 // pred_fallthru
        _
    $region6: #{tpu_custom_call.1} parent=1 // loop_footer
      %s27 = sadd.s32 1, %s23
    $region7: #{tpu_custom_call.1} parent=1 // loop_footer_branch
      %22 = sbr.rel target = $region3
    $region8: #{tpu_custom_call.1} parent=1 // loop_exit
      _
    %1379 = vsyncpa [#allocation3], 1
    %s1380 = scalar_lea.sflag [#allocation3], 1
    %1381 = vsyncpa %s1380, 1
    %1382 = vsyncpa [#allocation4], 1
    %s1383 = scalar_lea.sflag [#allocation4], 1
    %1384 = vsyncpa %s1383, 1
    %1385 = vsyncpa [#allocation8], 1
    %s1386 = scalar_lea.sflag [#allocation8], 1
    %1387 = vsyncpa %s1386, 1

</llo_original>
